<compile_context>
chip_gen: v5e
topology: v5e:2x2
jax: 0.10.0
libtpu: 0.0.40
codegen_flags: <defaults>
</compile_context>

<pallas_src>
import functools

import jax
import jax.numpy as jnp
from jax.experimental import pallas as pl
from jax.experimental.pallas import tpu as pltpu


def _round_up(x, m):
    return ((x + m - 1) // m) * m


def _card_mlp_kernel(n_hidden, in_features, x_ref, *refs):
    """Fused Card-like MLP for one batch tile.

    refs = (W0, b0, Wt0, bt0, ..., W_{n-1}, b_{n-1}, Wt_{n-1}, bt_{n-1},
            W_last, b_last, out_ref)
    """
    out_ref = refs[-1]
    p = refs[:-1]

    xb = x_ref[...]                                          # (TB, input_size)
    h = xb[:, :in_features]                                  # (TB, in_features)
    t_col = xb[:, in_features:in_features + 1].astype(jnp.float32)  # (TB, 1)

    idx = 0
    for _ in range(n_hidden):
        w_ref, b_ref, wt_ref, bt_ref = p[idx], p[idx + 1], p[idx + 2], p[idx + 3]
        idx += 4
        w = w_ref[...]
        # Feed the MXU at the weights' native dtype; accumulate in f32.
        h = jnp.dot(h.astype(w.dtype), w, preferred_element_type=jnp.float32)
        h = h + b_ref[...].astype(jnp.float32)
        # t-embedding Linear(1, hidden) == broadcast scale/shift (pure VPU, f32).
        temb = t_col * wt_ref[...].astype(jnp.float32) + bt_ref[...].astype(jnp.float32)
        h = jnp.maximum(h * temb, 0.0)

    w_ref, b_ref = p[idx], p[idx + 1]
    w = w_ref[...]
    h = jnp.dot(h.astype(w.dtype), w, preferred_element_type=jnp.float32)
    h = h + b_ref[...].astype(jnp.float32)
    out_ref[...] = h.astype(out_ref.dtype)


def card_mlp_forward(x, layers, t_embeddings, *, tb=512):
    """x: [batch, input_size]. layers: list of (W[in,out], b[1,out]).
    t_embeddings: list of (Wt[1,hidden], bt[1,hidden]), len == len(layers) - 1."""
    batch, input_size = x.shape
    n_hidden = len(t_embeddings)
    assert len(layers) == n_hidden + 1
    in_features = input_size - 1
    output_size = layers[-1][0].shape[1]

    # Batch tile: multiple of 8 sublanes (f32). Pad batch to a tile multiple.
    tb = max(8, min(_round_up(tb, 8), _round_up(batch, 8)))
    padded_batch = _round_up(batch, tb)
    if padded_batch != batch:
        x = jnp.pad(x, ((0, padded_batch - batch), (0, 0)))
    num_tiles = padded_batch // tb

    # Flatten params: per hidden layer (W, b, Wt, bt), then final (W, b).
    flat_params = []
    for i in range(n_hidden):
        flat_params.extend([layers[i][0], layers[i][1],
                            t_embeddings[i][0], t_embeddings[i][1]])
    flat_params.extend([layers[-1][0], layers[-1][1]])

    in_specs = [
        pl.BlockSpec((tb, input_size), lambda i: (i, 0)),    # x batch tile
    ]
    # Weights/biases: constant block index -> DMA'd once, resident in VMEM.
    for prm in flat_params:
        in_specs.append(pl.BlockSpec(prm.shape, lambda i: (0, 0)))

    out_spec = pl.BlockSpec((tb, output_size), lambda i: (i, 0))

    # Cost estimate for the XLA scheduler.
    layer_dims = [in_features] + [w.shape[1] for w, _ in layers]
    matmul_flops = 2 * batch * sum(layer_dims[i] * layer_dims[i + 1]
                                   for i in range(len(layers)))
    gate_flops = 4 * batch * sum(w.shape[1] for w, _ in layers[:-1])
    param_bytes = sum(int(p.size) * p.dtype.itemsize for p in flat_params)
    bytes_accessed = (x.size * x.dtype.itemsize
                      + batch * output_size * x.dtype.itemsize
                      + param_bytes)
    cost = pl.CostEstimate(flops=matmul_flops + gate_flops,
                           transcendentals=0,
                           bytes_accessed=bytes_accessed)

    # VMEM budget: resident params + double-buffered activation tiles + headroom.
    hidden_max = max(layer_dims[1:])
    tile_bytes = 4 * tb * (input_size + output_size + 2 * hidden_max)
    needed = param_bytes + 2 * tile_bytes
    vmem_limit = int(min(64 * 1024 * 1024, max(32 * 1024 * 1024, 2 * needed)))

    kernel = functools.partial(_card_mlp_kernel, n_hidden, in_features)
    out = pl.pallas_call(
        kernel,
        out_shape=jax.ShapeDtypeStruct((padded_batch, output_size), x.dtype),
        grid=(num_tiles,),
        in_specs=in_specs,
        out_specs=out_spec,
        compiler_params=pltpu.CompilerParams(
            dimension_semantics=("parallel",),
            vmem_limit_bytes=vmem_limit,
        ),
        cost_estimate=cost,
    )(x, *flat_params)

    return out[:batch]


def init_params(key, n_layers, hidden_size, input_size, output_size, dtype=jnp.float32):
    """Mimics nn.Linear init: U(-1/sqrt(fan_in), 1/sqrt(fan_in)). Weights stored [in, out]."""
    dims = [input_size - 1] + [hidden_size] * n_layers + [output_size]
    layers, t_embeddings = [], []
    for i in range(len(dims) - 1):
        fan_in, fan_out = dims[i], dims[i + 1]
        key, kw, kb = jax.random.split(key, 3)
        bound = 1.0 / (fan_in ** 0.5)
        w = jax.random.uniform(kw, (fan_in, fan_out), jnp.float32, -bound, bound)
        b = jax.random.uniform(kb, (1, fan_out), jnp.float32, -bound, bound)
        layers.append((w.astype(dtype), b.astype(dtype)))
        if i < len(dims) - 2:
            key, kwt, kbt = jax.random.split(key, 3)
            wt = jax.random.uniform(kwt, (1, hidden_size), jnp.float32, -1.0, 1.0)
            bt = jax.random.uniform(kbt, (1, hidden_size), jnp.float32, -1.0, 1.0)
            t_embeddings.append((wt.astype(dtype), bt.astype(dtype)))
    return layers, t_embeddings


def card_mlp_reference(x, layers, t_embeddings):
    """Plain-JAX reference mirroring the kernel numerics (and PyTorch semantics)."""
    yx = x[:, :-1].astype(jnp.float32)
    t_col = x[:, -1:].astype(jnp.float32)
    h = yx
    for i, (w, b) in enumerate(layers):
        h = jnp.dot(h.astype(w.dtype), w, preferred_element_type=jnp.float32)
        h = h + b.astype(jnp.float32)
        if i < len(layers) - 1:
            wt, bt = t_embeddings[i]
            h = h * (t_col * wt.astype(jnp.float32) + bt.astype(jnp.float32))
            h = jnp.maximum(h, 0.0)
    return h.astype(x.dtype)


if __name__ == "__main__":
    key = jax.random.PRNGKey(0)

    # Small shapes consistent with _CardLikeMLPModule: x = [y, x, t] features.
    n_layers, hidden_size, input_size, output_size = 3, 64, 17, 8
    batch = 48

    key, kx = jax.random.split(key)
    x = jax.random.normal(kx, (batch, input_size), jnp.float32)

    # f32 params: exact PyTorch semantics. tb=16 -> 3 grid tiles (exercises pipelining).
    layers, t_embs = init_params(key, n_layers, hidden_size, input_size, output_size)
    out = jax.block_until_ready(card_mlp_forward(x, layers, t_embs, tb=16))
    ref = card_mlp_reference(x, layers, t_embs)
    assert out.shape == (batch, output_size)
    assert jnp.allclose(out, ref, atol=1e-4, rtol=1e-3), "f32 Pallas Card-MLP mismatch"

    # Single-tile path (default large tb, clamped to padded batch).
    out_one = jax.block_until_ready(card_mlp_forward(x, layers, t_embs))
    assert jnp.allclose(out_one, ref, atol=1e-4, rtol=1e-3), "f32 single-tile mismatch"

    # bf16-weight path (halves resident-weight VMEM / DMA, bf16 MXU on v6e/v7x);
    # accumulation and the gate/ReLU stay in f32 inside the kernel.
    layers_bf16 = [(w.astype(jnp.bfloat16), b.astype(jnp.bfloat16)) for w, b in layers]
    t_embs_bf16 = [(w.astype(jnp.bfloat16), b.astype(jnp.bfloat16)) for w, b in t_embs]
    out_bf16 = jax.block_until_ready(card_mlp_forward(x, layers_bf16, t_embs_bf16, tb=16))
    ref_bf16 = card_mlp_reference(x, layers_bf16, t_embs_bf16)
    assert jnp.allclose(out_bf16, ref_bf16, atol=5e-2, rtol=5e-2), "bf16 Pallas Card-MLP mismatch"

    # TODO(synk): output_size (8) is far below the 128-lane width, so the final store is a
    # masked partial store; for production sizes pad hidden/output dims to multiples of 128.

    print("KERNEL_OK")
</pallas_src>

<mosaic_0001>
module attributes {stable_mosaic.version = 11 : i64} {
  func.func @_card_mlp_kernel(%arg0: i32, %arg1: memref<16x17xf32, #tpu.memory_space<vmem>>, %arg2: memref<16x64xf32, #tpu.memory_space<vmem>>, %arg3: memref<1x64xf32, #tpu.memory_space<vmem>>, %arg4: memref<1x64xf32, #tpu.memory_space<vmem>>, %arg5: memref<1x64xf32, #tpu.memory_space<vmem>>, %arg6: memref<64x64xf32, #tpu.memory_space<vmem>>, %arg7: memref<1x64xf32, #tpu.memory_space<vmem>>, %arg8: memref<1x64xf32, #tpu.memory_space<vmem>>, %arg9: memref<1x64xf32, #tpu.memory_space<vmem>>, %arg10: memref<64x64xf32, #tpu.memory_space<vmem>>, %arg11: memref<1x64xf32, #tpu.memory_space<vmem>>, %arg12: memref<1x64xf32, #tpu.memory_space<vmem>>, %arg13: memref<1x64xf32, #tpu.memory_space<vmem>>, %arg14: memref<64x8xf32, #tpu.memory_space<vmem>>, %arg15: memref<1x8xf32, #tpu.memory_space<vmem>>, %arg16: memref<16x8xf32, #tpu.memory_space<vmem>>) attributes {dimension_semantics = [#tpu.dimension_semantics<parallel>], iteration_bounds = array<i64: 3>, scalar_prefetch = 0 : i64, scratch_operands = 0 : i64, tpu.core_type = #tpu.core_type<tc>, window_params = [{transform_indices = @transform_0, window_bounds = array<i64: 16, 17>}, {pipeline_mode = #tpu.pipeline_mode<synchronous>, transform_indices = @transform_1, window_bounds = array<i64: 16, 64>}, {pipeline_mode = #tpu.pipeline_mode<synchronous>, transform_indices = @transform_2, window_bounds = array<i64: 1, 64>}, {pipeline_mode = #tpu.pipeline_mode<synchronous>, transform_indices = @transform_3, window_bounds = array<i64: 1, 64>}, {pipeline_mode = #tpu.pipeline_mode<synchronous>, transform_indices = @transform_4, window_bounds = array<i64: 1, 64>}, {pipeline_mode = #tpu.pipeline_mode<synchronous>, transform_indices = @transform_5, window_bounds = array<i64: 64, 64>}, {pipeline_mode = #tpu.pipeline_mode<synchronous>, transform_indices = @transform_6, window_bounds = array<i64: 1, 64>}, {pipeline_mode = #tpu.pipeline_mode<synchronous>, transform_indices = @transform_7, window_bounds = array<i64: 1, 64>}, {pipeline_mode = #tpu.pipeline_mode<synchronous>, transform_indices = @transform_8, window_bounds = array<i64: 1, 64>}, {pipeline_mode = #tpu.pipeline_mode<synchronous>, transform_indices = @transform_9, window_bounds = array<i64: 64, 64>}, {pipeline_mode = #tpu.pipeline_mode<synchronous>, transform_indices = @transform_10, window_bounds = array<i64: 1, 64>}, {pipeline_mode = #tpu.pipeline_mode<synchronous>, transform_indices = @transform_11, window_bounds = array<i64: 1, 64>}, {pipeline_mode = #tpu.pipeline_mode<synchronous>, transform_indices = @transform_12, window_bounds = array<i64: 1, 64>}, {pipeline_mode = #tpu.pipeline_mode<synchronous>, transform_indices = @transform_13, window_bounds = array<i64: 64, 8>}, {pipeline_mode = #tpu.pipeline_mode<synchronous>, transform_indices = @transform_14, window_bounds = array<i64: 1, 8>}, {transform_indices = @transform_15, window_bounds = array<i64: 16, 8>}]} {
    %c0 = arith.constant 0 : index
    %c0_0 = arith.constant 0 : index
    %0 = vector.load %arg1[%c0, %c0_0] : memref<16x17xf32, #tpu.memory_space<vmem>>, vector<16x17xf32>
    %1 = vector.extract_strided_slice %0 {offsets = [0, 0], sizes = [16, 16], strides = [1, 1]} : vector<16x17xf32> to vector<16x16xf32>
    %2 = vector.extract_strided_slice %0 {offsets = [0, 16], sizes = [16, 1], strides = [1, 1]} : vector<16x17xf32> to vector<16x1xf32>
    %c0_1 = arith.constant 0 : index
    %c0_2 = arith.constant 0 : index
    %3 = vector.load %arg2[%c0_1, %c0_2] : memref<16x64xf32, #tpu.memory_space<vmem>>, vector<16x64xf32>
    %cst = arith.constant dense<0.000000e+00> : vector<16x64xf32>
    %4 = tpu.matmul %1, %3, %cst {dimension_numbers = #tpu.dot_dimension_numbers<[1], [0], [0], [1], [0, 0, 1, 1], [], []>} : vector<16x16xf32>, vector<16x64xf32>, vector<16x64xf32> -> vector<16x64xf32>
    %c0_3 = arith.constant 0 : index
    %c0_4 = arith.constant 0 : index
    %5 = vector.load %arg3[%c0_3, %c0_4] : memref<1x64xf32, #tpu.memory_space<vmem>>, vector<1x64xf32>
    %6 = vector.broadcast %5 : vector<1x64xf32> to vector<16x64xf32>
    %7 = arith.addf %4, %6 : vector<16x64xf32>
    %c0_5 = arith.constant 0 : index
    %c0_6 = arith.constant 0 : index
    %8 = vector.load %arg4[%c0_5, %c0_6] : memref<1x64xf32, #tpu.memory_space<vmem>>, vector<1x64xf32>
    %9 = vector.broadcast %2 : vector<16x1xf32> to vector<16x64xf32>
    %10 = vector.broadcast %8 : vector<1x64xf32> to vector<16x64xf32>
    %11 = arith.mulf %9, %10 : vector<16x64xf32>
    %c0_7 = arith.constant 0 : index
    %c0_8 = arith.constant 0 : index
    %12 = vector.load %arg5[%c0_7, %c0_8] : memref<1x64xf32, #tpu.memory_space<vmem>>, vector<1x64xf32>
    %13 = vector.broadcast %12 : vector<1x64xf32> to vector<16x64xf32>
    %14 = arith.addf %11, %13 : vector<16x64xf32>
    %15 = arith.mulf %7, %14 : vector<16x64xf32>
    %cst_9 = arith.constant 0.000000e+00 : f32
    %16 = vector.broadcast %cst_9 : f32 to vector<16x64xf32>
    %17 = arith.maximumf %15, %16 : vector<16x64xf32>
    %c0_10 = arith.constant 0 : index
    %c0_11 = arith.constant 0 : index
    %18 = vector.load %arg6[%c0_10, %c0_11] : memref<64x64xf32, #tpu.memory_space<vmem>>, vector<64x64xf32>
    %cst_12 = arith.constant dense<0.000000e+00> : vector<16x64xf32>
    %19 = tpu.matmul %17, %18, %cst_12 {dimension_numbers = #tpu.dot_dimension_numbers<[1], [0], [0], [1], [0, 0, 1, 1], [], []>} : vector<16x64xf32>, vector<64x64xf32>, vector<16x64xf32> -> vector<16x64xf32>
    %c0_13 = arith.constant 0 : index
    %c0_14 = arith.constant 0 : index
    %20 = vector.load %arg7[%c0_13, %c0_14] : memref<1x64xf32, #tpu.memory_space<vmem>>, vector<1x64xf32>
    %21 = vector.broadcast %20 : vector<1x64xf32> to vector<16x64xf32>
    %22 = arith.addf %19, %21 : vector<16x64xf32>
    %c0_15 = arith.constant 0 : index
    %c0_16 = arith.constant 0 : index
    %23 = vector.load %arg8[%c0_15, %c0_16] : memref<1x64xf32, #tpu.memory_space<vmem>>, vector<1x64xf32>
    %24 = vector.broadcast %2 : vector<16x1xf32> to vector<16x64xf32>
    %25 = vector.broadcast %23 : vector<1x64xf32> to vector<16x64xf32>
    %26 = arith.mulf %24, %25 : vector<16x64xf32>
    %c0_17 = arith.constant 0 : index
    %c0_18 = arith.constant 0 : index
    %27 = vector.load %arg9[%c0_17, %c0_18] : memref<1x64xf32, #tpu.memory_space<vmem>>, vector<1x64xf32>
    %28 = vector.broadcast %27 : vector<1x64xf32> to vector<16x64xf32>
    %29 = arith.addf %26, %28 : vector<16x64xf32>
    %30 = arith.mulf %22, %29 : vector<16x64xf32>
    %cst_19 = arith.constant 0.000000e+00 : f32
    %31 = vector.broadcast %cst_19 : f32 to vector<16x64xf32>
    %32 = arith.maximumf %30, %31 : vector<16x64xf32>
    %c0_20 = arith.constant 0 : index
    %c0_21 = arith.constant 0 : index
    %33 = vector.load %arg10[%c0_20, %c0_21] : memref<64x64xf32, #tpu.memory_space<vmem>>, vector<64x64xf32>
    %cst_22 = arith.constant dense<0.000000e+00> : vector<16x64xf32>
    %34 = tpu.matmul %32, %33, %cst_22 {dimension_numbers = #tpu.dot_dimension_numbers<[1], [0], [0], [1], [0, 0, 1, 1], [], []>} : vector<16x64xf32>, vector<64x64xf32>, vector<16x64xf32> -> vector<16x64xf32>
    %c0_23 = arith.constant 0 : index
    %c0_24 = arith.constant 0 : index
    %35 = vector.load %arg11[%c0_23, %c0_24] : memref<1x64xf32, #tpu.memory_space<vmem>>, vector<1x64xf32>
    %36 = vector.broadcast %35 : vector<1x64xf32> to vector<16x64xf32>
    %37 = arith.addf %34, %36 : vector<16x64xf32>
    %c0_25 = arith.constant 0 : index
    %c0_26 = arith.constant 0 : index
    %38 = vector.load %arg12[%c0_25, %c0_26] : memref<1x64xf32, #tpu.memory_space<vmem>>, vector<1x64xf32>
    %39 = vector.broadcast %2 : vector<16x1xf32> to vector<16x64xf32>
    %40 = vector.broadcast %38 : vector<1x64xf32> to vector<16x64xf32>
    %41 = arith.mulf %39, %40 : vector<16x64xf32>
    %c0_27 = arith.constant 0 : index
    %c0_28 = arith.constant 0 : index
    %42 = vector.load %arg13[%c0_27, %c0_28] : memref<1x64xf32, #tpu.memory_space<vmem>>, vector<1x64xf32>
    %43 = vector.broadcast %42 : vector<1x64xf32> to vector<16x64xf32>
    %44 = arith.addf %41, %43 : vector<16x64xf32>
    %45 = arith.mulf %37, %44 : vector<16x64xf32>
    %cst_29 = arith.constant 0.000000e+00 : f32
    %46 = vector.broadcast %cst_29 : f32 to vector<16x64xf32>
    %47 = arith.maximumf %45, %46 : vector<16x64xf32>
    %c0_30 = arith.constant 0 : index
    %c0_31 = arith.constant 0 : index
    %48 = vector.load %arg14[%c0_30, %c0_31] : memref<64x8xf32, #tpu.memory_space<vmem>>, vector<64x8xf32>
    %cst_32 = arith.constant dense<0.000000e+00> : vector<16x8xf32>
    %49 = tpu.matmul %47, %48, %cst_32 {dimension_numbers = #tpu.dot_dimension_numbers<[1], [0], [0], [1], [0, 0, 1, 1], [], []>} : vector<16x64xf32>, vector<64x8xf32>, vector<16x8xf32> -> vector<16x8xf32>
    %c0_33 = arith.constant 0 : index
    %c0_34 = arith.constant 0 : index
    %50 = vector.load %arg15[%c0_33, %c0_34] : memref<1x8xf32, #tpu.memory_space<vmem>>, vector<1x8xf32>
    %51 = vector.broadcast %50 : vector<1x8xf32> to vector<16x8xf32>
    %52 = arith.addf %49, %51 : vector<16x8xf32>
    %c0_35 = arith.constant 0 : index
    %c0_36 = arith.constant 0 : index
    %53 = vector.load %arg16[%c0_35, %c0_36] : memref<16x8xf32, #tpu.memory_space<vmem>>, vector<16x8xf32>
    tpu.vector_store %arg16[%c0_35, %c0_36], %52 {strides = array<i32>} : memref<16x8xf32, #tpu.memory_space<vmem>>, vector<16x8xf32>,
    return
  }
  func.func @transform_0(%arg0: i32) -> (i32, i32) {
    %c0_i32 = arith.constant 0 : i32
    %c0_i32_0 = arith.constant 0 : i32
    return %arg0, %c0_i32 : i32, i32
  }
  func.func @transform_1(%arg0: i32) -> (i32, i32) {
    %c0_i32 = arith.constant 0 : i32
    %c0_i32_0 = arith.constant 0 : i32
    %c0_i32_1 = arith.constant 0 : i32
    return %c0_i32, %c0_i32_0 : i32, i32
  }
  func.func @transform_2(%arg0: i32) -> (i32, i32) {
    %c0_i32 = arith.constant 0 : i32
    %c0_i32_0 = arith.constant 0 : i32
    %c0_i32_1 = arith.constant 0 : i32
    return %c0_i32, %c0_i32_0 : i32, i32
  }
  func.func @transform_3(%arg0: i32) -> (i32, i32) {
    %c0_i32 = arith.constant 0 : i32
    %c0_i32_0 = arith.constant 0 : i32
    %c0_i32_1 = arith.constant 0 : i32
    return %c0_i32, %c0_i32_0 : i32, i32
  }
  func.func @transform_4(%arg0: i32) -> (i32, i32) {
    %c0_i32 = arith.constant 0 : i32
    %c0_i32_0 = arith.constant 0 : i32
    %c0_i32_1 = arith.constant 0 : i32
    return %c0_i32, %c0_i32_0 : i32, i32
  }
  func.func @transform_5(%arg0: i32) -> (i32, i32) {
    %c0_i32 = arith.constant 0 : i32
    %c0_i32_0 = arith.constant 0 : i32
    %c0_i32_1 = arith.constant 0 : i32
    return %c0_i32, %c0_i32_0 : i32, i32
  }
  func.func @transform_6(%arg0: i32) -> (i32, i32) {
    %c0_i32 = arith.constant 0 : i32
    %c0_i32_0 = arith.constant 0 : i32
    %c0_i32_1 = arith.constant 0 : i32
    return %c0_i32, %c0_i32_0 : i32, i32
  }
  func.func @transform_7(%arg0: i32) -> (i32, i32) {
    %c0_i32 = arith.constant 0 : i32
    %c0_i32_0 = arith.constant 0 : i32
    %c0_i32_1 = arith.constant 0 : i32
    return %c0_i32, %c0_i32_0 : i32, i32
  }
  func.func @transform_8(%arg0: i32) -> (i32, i32) {
    %c0_i32 = arith.constant 0 : i32
    %c0_i32_0 = arith.constant 0 : i32
    %c0_i32_1 = arith.constant 0 : i32
    return %c0_i32, %c0_i32_0 : i32, i32
  }
  func.func @transform_9(%arg0: i32) -> (i32, i32) {
    %c0_i32 = arith.constant 0 : i32
    %c0_i32_0 = arith.constant 0 : i32
    %c0_i32_1 = arith.constant 0 : i32
    return %c0_i32, %c0_i32_0 : i32, i32
  }
  func.func @transform_10(%arg0: i32) -> (i32, i32) {
    %c0_i32 = arith.constant 0 : i32
    %c0_i32_0 = arith.constant 0 : i32
    %c0_i32_1 = arith.constant 0 : i32
    return %c0_i32, %c0_i32_0 : i32, i32
  }
  func.func @transform_11(%arg0: i32) -> (i32, i32) {
    %c0_i32 = arith.constant 0 : i32
    %c0_i32_0 = arith.constant 0 : i32
    %c0_i32_1 = arith.constant 0 : i32
    return %c0_i32, %c0_i32_0 : i32, i32
  }
  func.func @transform_12(%arg0: i32) -> (i32, i32) {
    %c0_i32 = arith.constant 0 : i32
    %c0_i32_0 = arith.constant 0 : i32
    %c0_i32_1 = arith.constant 0 : i32
    return %c0_i32, %c0_i32_0 : i32, i32
  }
  func.func @transform_13(%arg0: i32) -> (i32, i32) {
    %c0_i32 = arith.constant 0 : i32
    %c0_i32_0 = arith.constant 0 : i32
    %c0_i32_1 = arith.constant 0 : i32
    return %c0_i32, %c0_i32_0 : i32, i32
  }
  func.func @transform_14(%arg0: i32) -> (i32, i32) {
    %c0_i32 = arith.constant 0 : i32
    %c0_i32_0 = arith.constant 0 : i32
    %c0_i32_1 = arith.constant 0 : i32
    return %c0_i32, %c0_i32_0 : i32, i32
  }
  func.func @transform_15(%arg0: i32) -> (i32, i32) {
    %c0_i32 = arith.constant 0 : i32
    %c0_i32_0 = arith.constant 0 : i32
    return %arg0, %c0_i32 : i32, i32
  }
}

</mosaic_0001>

<llo_original>
// kernel: tpu_custom_call.1
$region0: #{tpu_custom_call.1}
  #allocation0 [shape = 'u32[]', space=smem, size = 0x4, offset = 0x4, fixed_abs, tag = 'smem constant byte address 0x4 - core index']
  #allocation1 [shape = 'u32[72,128]{1,0:T(1,128)}', space=vmem, size = 0x9000, scoped, tag = 'internal scratch']
  %s0 = inlined_call_operand.vmem [shape: f32[48,17], index: 0, kind: input, shape index: {}]
  %s1 = inlined_call_operand.vmem [shape: f32[16,64], index: 1, kind: input, shape index: {}]
  %s2 = inlined_call_operand.hbm [shape: f32[1,64], index: 2, kind: input, shape index: {}]
  %s3 = inlined_call_operand.hbm [shape: f32[1,64], index: 3, kind: input, shape index: {}]
  %s4 = inlined_call_operand.hbm [shape: f32[1,64], index: 4, kind: input, shape index: {}]
  %s5 = inlined_call_operand.vmem [shape: f32[64,64], index: 5, kind: input, shape index: {}]
  %s6 = inlined_call_operand.hbm [shape: f32[1,64], index: 6, kind: input, shape index: {}]
  %s7 = inlined_call_operand.hbm [shape: f32[1,64], index: 7, kind: input, shape index: {}]
  %s8 = inlined_call_operand.hbm [shape: f32[1,64], index: 8, kind: input, shape index: {}]
  %s9 = inlined_call_operand.vmem [shape: f32[64,64], index: 9, kind: input, shape index: {}]
  %s10 = inlined_call_operand.vmem [shape: f32[1,64], index: 10, kind: input, shape index: {}]
  %s11 = inlined_call_operand.hbm [shape: f32[1,64], index: 11, kind: input, shape index: {}]
  %s12 = inlined_call_operand.vmem [shape: f32[1,64], index: 12, kind: input, shape index: {}]
  %s13 = inlined_call_operand.vmem [shape: f32[64,8], index: 13, kind: input, shape index: {}]
  %s14 = inlined_call_operand.vmem [shape: f32[1,8], index: 14, kind: input, shape index: {}]
  %s15 = inlined_call_operand.vmem [shape: f32[48,8], index: 15, kind: output, shape index: {}]
  %s16 = sld [smem:[#allocation0]]
  $region121: #{tpu_custom_call.1} parent=0
    _
  %s18 = ssub.s32 1, %s16
  %s19 = scalar_select 0, %s18, %s16
  $region1: #{tpu_custom_call.1} parent=0
    #allocation2 [shape = 'u8[512]{0}', space=vmem, size = 0x400, scoped, tag = 'input window, operand 2, single buffered']
    #allocation3 [shape = 's32[2]{0}', space=sflag, size = 0x8, scoped, tag = 'scoped memory for tpu_custom_call.1']
    #allocation4 [shape = 'u8[512]{0}', space=vmem, size = 0x400, scoped, tag = 'input window, operand 3, single buffered']
    #allocation5 [shape = 's32[1]{0}', space=sflag, size = 0x4, scoped, tag = 'scoped memory for tpu_custom_call.1']
    #allocation6 [shape = 'u8[512]{0}', space=vmem, size = 0x400, scoped, tag = 'input window, operand 4, single buffered']
    #allocation7 [shape = 'u8[512]{0}', space=vmem, size = 0x400, scoped, tag = 'input window, operand 6, single buffered']
    #allocation8 [shape = 's32[1]{0}', space=sflag, size = 0x4, scoped, tag = 'scoped memory for tpu_custom_call.1']
    #allocation9 [shape = 'u8[512]{0}', space=vmem, size = 0x400, scoped, tag = 'input window, operand 7, single buffered']
    #allocation10 [shape = 'u8[512]{0}', space=vmem, size = 0x400, scoped, tag = 'input window, operand 8, single buffered']
    #allocation11 [shape = 's32[1]{0}', space=sflag, size = 0x4, scoped, tag = 'scoped memory for tpu_custom_call.1']
    #allocation12 [shape = 'u8[512]{0}', space=vmem, size = 0x400, scoped, tag = 'input window, operand 11, single buffered']
    %20 = vsyncpa [#allocation3], 0
    %21 = vsyncpa [#allocation5], 0
    %22 = vsyncpa [#allocation8], 0
    %23 = vsyncpa [#allocation11], 0
    loop: start=0, step=1, limit=5
    $region2: #{tpu_custom_call.1} parent=1 // loop_pre_header
      _
    $region3: #{tpu_custom_call.1} parent=1 // loop_header
      %s25 = sphi 0, %s29
      %p26 = scmp.ge.s32.totalorder %s25, 5
      %s35 = sphi 0, %s37
      %s38 = sphi 0, %s35
      %s39 = sphi 0, %s38
      %s55 = sphi 0, %s39
      %s59 = sphi 0, %s59
      %s61 = sphi 0, %s59
      %s62 = sphi 0, %s61
      %s76 = sphi 0, %s62
      %s80 = sphi 0, %s80
      %s82 = sphi 0, %s80
      %s83 = sphi 0, %s82
      %s97 = sphi 0, %s83
      %s101 = sphi 0, %s101
      %s103 = sphi 0, %s101
      %s104 = sphi 0, %s103
      %s118 = sphi 0, %s104
      %s122 = sphi 0, %s122
      %s124 = sphi 0, %s122
      %s125 = sphi 0, %s124
      %s139 = sphi 0, %s125
      %s143 = sphi 0, %s143
      %s145 = sphi 0, %s143
      %s146 = sphi 0, %s145
      %s160 = sphi 0, %s146
      %s164 = sphi 0, %s164
      %s166 = sphi 0, %s164
      %s167 = sphi 0, %s166
      %s181 = sphi 0, %s167
      %s185 = sphi 0, %s185
      %s187 = sphi 0, %s185
      %s188 = sphi 0, %s187
      %s202 = sphi 0, %s188
      %s206 = sphi 0, %s206
      %s208 = sphi 0, %s206
      %s209 = sphi 0, %s208
      %s223 = sphi 0, %s209
      %s227 = sphi 0, %s227
      %s229 = sphi 0, %s227
      %s230 = sphi 0, %s229
      %s244 = sphi 0, %s230
      %s248 = sphi 0, %s248
      %s250 = sphi 0, %s248
      %s251 = sphi 0, %s250
      %s265 = sphi 0, %s251
      %s269 = sphi 0, %s269
      %s271 = sphi 0, %s269
      %s272 = sphi 0, %s271
      %s286 = sphi 0, %s272
      %s290 = sphi 0, %s290
      %s292 = sphi 0, %s290
      %s293 = sphi 0, %s292
      %s307 = sphi 0, %s293
      %s311 = sphi 0, %s311
      %s313 = sphi 0, %s311
      %s314 = sphi 0, %s313
      %s328 = sphi 0, %s314
      %s332 = sphi 0, %s332
      %s334 = sphi 0, %s332
      %s335 = sphi 0, %s334
      %s349 = sphi 0, %s335
      %s355 = sphi 0, %s357
      %s358 = sphi 0, %s355
      %s359 = sphi 0, %s358
      %s375 = sphi 0, %s359
    $region4: #{tpu_custom_call.1} parent=1 // loop_header_branch
      %28 = sbr.rel (%p26) target = $region8
    $region5: #{tpu_custom_call.1} parent=1 // loop_body
      %s30 = ssub.s32 %s25, 1
      %s31 = ssub.s32 %s25, 2
      %s32 = sadd.s32 %s25, 1
      %s33 = ssub.s32 %s25, %s32
      %p34 = scmp.eq.s32.totalorder %s33, 0
      %s36 = sadd.s32 %s35, 1
      %s37 = scalar_select %p34, %s35, %s36
      %p40 = pneg %p34
      %p41 = scmp.eq.s32.totalorder %s25, 2
      %p42 = por %p40, %p41
      %p43 = scmp.ne.s32.totalorder %s35, %s38
      %p44 = scmp.eq.s32.totalorder %s25, 0
      %p45 = por %p43, %p44
      %p46 = scmp.ne.s32.totalorder %s35, %s38
      %p47 = scmp.eq.s32.totalorder %s30, 2
      %p48 = por %p46, %p47
      %p49 = scmp.ne.s32.totalorder %s38, %s39
      %p50 = scmp.eq.s32.totalorder %s30, 0
      %p51 = por %p49, %p50
      %p52 = scmp.ne.s32.totalorder %s38, %s39
      %p53 = scmp.eq.s32.totalorder %s31, 2
      %p54 = por %p52, %p53
      %p56 = scmp.ne.s32.totalorder %s39, %s55
      %p57 = scmp.eq.s32.totalorder %s31, 0
      %p58 = por %p56, %p57
      %s60 = sadd.s32 %s59, 1
      %p63 = scmp.eq.s32.totalorder %s25, 2
      %p64 = scmp.ne.s32.totalorder %s59, %s61
      %p65 = scmp.eq.s32.totalorder %s25, 0
      %p66 = por %p64, %p65
      %p67 = scmp.ne.s32.totalorder %s59, %s61
      %p68 = scmp.eq.s32.totalorder %s30, 2
      %p69 = por %p67, %p68
      %p70 = scmp.ne.s32.totalorder %s61, %s62
      %p71 = scmp.eq.s32.totalorder %s30, 0
      %p72 = por %p70, %p71
      %p73 = scmp.ne.s32.totalorder %s61, %s62
      %p74 = scmp.eq.s32.totalorder %s31, 2
      %p75 = por %p73, %p74
      %p77 = scmp.ne.s32.totalorder %s62, %s76
      %p78 = scmp.eq.s32.totalorder %s31, 0
      %p79 = por %p77, %p78
      %s81 = sadd.s32 %s80, 1
      %p84 = scmp.eq.s32.totalorder %s25, 2
      %p85 = scmp.ne.s32.totalorder %s80, %s82
      %p86 = scmp.eq.s32.totalorder %s25, 0
      %p87 = por %p85, %p86
      %p88 = scmp.ne.s32.totalorder %s80, %s82
      %p89 = scmp.eq.s32.totalorder %s30, 2
      %p90 = por %p88, %p89
      %p91 = scmp.ne.s32.totalorder %s82, %s83
      %p92 = scmp.eq.s32.totalorder %s30, 0
      %p93 = por %p91, %p92
      %p94 = scmp.ne.s32.totalorder %s82, %s83
      %p95 = scmp.eq.s32.totalorder %s31, 2
      %p96 = por %p94, %p95
      %p98 = scmp.ne.s32.totalorder %s83, %s97
      %p99 = scmp.eq.s32.totalorder %s31, 0
      %p100 = por %p98, %p99
      %s102 = sadd.s32 %s101, 1
      %p105 = scmp.eq.s32.totalorder %s25, 2
      %p106 = scmp.ne.s32.totalorder %s101, %s103
      %p107 = scmp.eq.s32.totalorder %s25, 0
      %p108 = por %p106, %p107
      %p109 = scmp.ne.s32.totalorder %s101, %s103
      %p110 = scmp.eq.s32.totalorder %s30, 2
      %p111 = por %p109, %p110
      %p112 = scmp.ne.s32.totalorder %s103, %s104
      %p113 = scmp.eq.s32.totalorder %s30, 0
      %p114 = por %p112, %p113
      %p115 = scmp.ne.s32.totalorder %s103, %s104
      %p116 = scmp.eq.s32.totalorder %s31, 2
      %p117 = por %p115, %p116
      %p119 = scmp.ne.s32.totalorder %s104, %s118
      %p120 = scmp.eq.s32.totalorder %s31, 0
      %p121 = por %p119, %p120
      %s123 = sadd.s32 %s122, 1
      %p126 = scmp.eq.s32.totalorder %s25, 2
      %p127 = scmp.ne.s32.totalorder %s122, %s124
      %p128 = scmp.eq.s32.totalorder %s25, 0
      %p129 = por %p127, %p128
      %p130 = scmp.ne.s32.totalorder %s122, %s124
      %p131 = scmp.eq.s32.totalorder %s30, 2
      %p132 = por %p130, %p131
      %p133 = scmp.ne.s32.totalorder %s124, %s125
      %p134 = scmp.eq.s32.totalorder %s30, 0
      %p135 = por %p133, %p134
      %p136 = scmp.ne.s32.totalorder %s124, %s125
      %p137 = scmp.eq.s32.totalorder %s31, 2
      %p138 = por %p136, %p137
      %p140 = scmp.ne.s32.totalorder %s125, %s139
      %p141 = scmp.eq.s32.totalorder %s31, 0
      %p142 = por %p140, %p141
      %s144 = sadd.s32 %s143, 1
      %p147 = scmp.eq.s32.totalorder %s25, 2
      %p148 = scmp.ne.s32.totalorder %s143, %s145
      %p149 = scmp.eq.s32.totalorder %s25, 0
      %p150 = por %p148, %p149
      %p151 = scmp.ne.s32.totalorder %s143, %s145
      %p152 = scmp.eq.s32.totalorder %s30, 2
      %p153 = por %p151, %p152
      %p154 = scmp.ne.s32.totalorder %s145, %s146
      %p155 = scmp.eq.s32.totalorder %s30, 0
      %p156 = por %p154, %p155
      %p157 = scmp.ne.s32.totalorder %s145, %s146
      %p158 = scmp.eq.s32.totalorder %s31, 2
      %p159 = por %p157, %p158
      %p161 = scmp.ne.s32.totalorder %s146, %s160
      %p162 = scmp.eq.s32.totalorder %s31, 0
      %p163 = por %p161, %p162
      %s165 = sadd.s32 %s164, 1
      %p168 = scmp.eq.s32.totalorder %s25, 2
      %p169 = scmp.ne.s32.totalorder %s164, %s166
      %p170 = scmp.eq.s32.totalorder %s25, 0
      %p171 = por %p169, %p170
      %p172 = scmp.ne.s32.totalorder %s164, %s166
      %p173 = scmp.eq.s32.totalorder %s30, 2
      %p174 = por %p172, %p173
      %p175 = scmp.ne.s32.totalorder %s166, %s167
      %p176 = scmp.eq.s32.totalorder %s30, 0
      %p177 = por %p175, %p176
      %p178 = scmp.ne.s32.totalorder %s166, %s167
      %p179 = scmp.eq.s32.totalorder %s31, 2
      %p180 = por %p178, %p179
      %p182 = scmp.ne.s32.totalorder %s167, %s181
      %p183 = scmp.eq.s32.totalorder %s31, 0
      %p184 = por %p182, %p183
      %s186 = sadd.s32 %s185, 1
      %p189 = scmp.eq.s32.totalorder %s25, 2
      %p190 = scmp.ne.s32.totalorder %s185, %s187
      %p191 = scmp.eq.s32.totalorder %s25, 0
      %p192 = por %p190, %p191
      %p193 = scmp.ne.s32.totalorder %s185, %s187
      %p194 = scmp.eq.s32.totalorder %s30, 2
      %p195 = por %p193, %p194
      %p196 = scmp.ne.s32.totalorder %s187, %s188
      %p197 = scmp.eq.s32.totalorder %s30, 0
      %p198 = por %p196, %p197
      %p199 = scmp.ne.s32.totalorder %s187, %s188
      %p200 = scmp.eq.s32.totalorder %s31, 2
      %p201 = por %p199, %p200
      %p203 = scmp.ne.s32.totalorder %s188, %s202
      %p204 = scmp.eq.s32.totalorder %s31, 0
      %p205 = por %p203, %p204
      %s207 = sadd.s32 %s206, 1
      %p210 = scmp.eq.s32.totalorder %s25, 2
      %p211 = scmp.ne.s32.totalorder %s206, %s208
      %p212 = scmp.eq.s32.totalorder %s25, 0
      %p213 = por %p211, %p212
      %p214 = scmp.ne.s32.totalorder %s206, %s208
      %p215 = scmp.eq.s32.totalorder %s30, 2
      %p216 = por %p214, %p215
      %p217 = scmp.ne.s32.totalorder %s208, %s209
      %p218 = scmp.eq.s32.totalorder %s30, 0
      %p219 = por %p217, %p218
      %p220 = scmp.ne.s32.totalorder %s208, %s209
      %p221 = scmp.eq.s32.totalorder %s31, 2
      %p222 = por %p220, %p221
      %p224 = scmp.ne.s32.totalorder %s209, %s223
      %p225 = scmp.eq.s32.totalorder %s31, 0
      %p226 = por %p224, %p225
      %s228 = sadd.s32 %s227, 1
      %p231 = scmp.eq.s32.totalorder %s25, 2
      %p232 = scmp.ne.s32.totalorder %s227, %s229
      %p233 = scmp.eq.s32.totalorder %s25, 0
      %p234 = por %p232, %p233
      %p235 = scmp.ne.s32.totalorder %s227, %s229
      %p236 = scmp.eq.s32.totalorder %s30, 2
      %p237 = por %p235, %p236
      %p238 = scmp.ne.s32.totalorder %s229, %s230
      %p239 = scmp.eq.s32.totalorder %s30, 0
      %p240 = por %p238, %p239
      %p241 = scmp.ne.s32.totalorder %s229, %s230
      %p242 = scmp.eq.s32.totalorder %s31, 2
      %p243 = por %p241, %p242
      %p245 = scmp.ne.s32.totalorder %s230, %s244
      %p246 = scmp.eq.s32.totalorder %s31, 0
      %p247 = por %p245, %p246
      %s249 = sadd.s32 %s248, 1
      %p252 = scmp.eq.s32.totalorder %s25, 2
      %p253 = scmp.ne.s32.totalorder %s248, %s250
      %p254 = scmp.eq.s32.totalorder %s25, 0
      %p255 = por %p253, %p254
      %p256 = scmp.ne.s32.totalorder %s248, %s250
      %p257 = scmp.eq.s32.totalorder %s30, 2
      %p258 = por %p256, %p257
      %p259 = scmp.ne.s32.totalorder %s250, %s251
      %p260 = scmp.eq.s32.totalorder %s30, 0
      %p261 = por %p259, %p260
      %p262 = scmp.ne.s32.totalorder %s250, %s251
      %p263 = scmp.eq.s32.totalorder %s31, 2
      %p264 = por %p262, %p263
      %p266 = scmp.ne.s32.totalorder %s251, %s265
      %p267 = scmp.eq.s32.totalorder %s31, 0
      %p268 = por %p266, %p267
      %s270 = sadd.s32 %s269, 1
      %p273 = scmp.eq.s32.totalorder %s25, 2
      %p274 = scmp.ne.s32.totalorder %s269, %s271
      %p275 = scmp.eq.s32.totalorder %s25, 0
      %p276 = por %p274, %p275
      %p277 = scmp.ne.s32.totalorder %s269, %s271
      %p278 = scmp.eq.s32.totalorder %s30, 2
      %p279 = por %p277, %p278
      %p280 = scmp.ne.s32.totalorder %s271, %s272
      %p281 = scmp.eq.s32.totalorder %s30, 0
      %p282 = por %p280, %p281
      %p283 = scmp.ne.s32.totalorder %s271, %s272
      %p284 = scmp.eq.s32.totalorder %s31, 2
      %p285 = por %p283, %p284
      %p287 = scmp.ne.s32.totalorder %s272, %s286
      %p288 = scmp.eq.s32.totalorder %s31, 0
      %p289 = por %p287, %p288
      %s291 = sadd.s32 %s290, 1
      %p294 = scmp.eq.s32.totalorder %s25, 2
      %p295 = scmp.ne.s32.totalorder %s290, %s292
      %p296 = scmp.eq.s32.totalorder %s25, 0
      %p297 = por %p295, %p296
      %p298 = scmp.ne.s32.totalorder %s290, %s292
      %p299 = scmp.eq.s32.totalorder %s30, 2
      %p300 = por %p298, %p299
      %p301 = scmp.ne.s32.totalorder %s292, %s293
      %p302 = scmp.eq.s32.totalorder %s30, 0
      %p303 = por %p301, %p302
      %p304 = scmp.ne.s32.totalorder %s292, %s293
      %p305 = scmp.eq.s32.totalorder %s31, 2
      %p306 = por %p304, %p305
      %p308 = scmp.ne.s32.totalorder %s293, %s307
      %p309 = scmp.eq.s32.totalorder %s31, 0
      %p310 = por %p308, %p309
      %s312 = sadd.s32 %s311, 1
      %p315 = scmp.eq.s32.totalorder %s25, 2
      %p316 = scmp.ne.s32.totalorder %s311, %s313
      %p317 = scmp.eq.s32.totalorder %s25, 0
      %p318 = por %p316, %p317
      %p319 = scmp.ne.s32.totalorder %s311, %s313
      %p320 = scmp.eq.s32.totalorder %s30, 2
      %p321 = por %p319, %p320
      %p322 = scmp.ne.s32.totalorder %s313, %s314
      %p323 = scmp.eq.s32.totalorder %s30, 0
      %p324 = por %p322, %p323
      %p325 = scmp.ne.s32.totalorder %s313, %s314
      %p326 = scmp.eq.s32.totalorder %s31, 2
      %p327 = por %p325, %p326
      %p329 = scmp.ne.s32.totalorder %s314, %s328
      %p330 = scmp.eq.s32.totalorder %s31, 0
      %p331 = por %p329, %p330
      %s333 = sadd.s32 %s332, 1
      %p336 = scmp.eq.s32.totalorder %s25, 2
      %p337 = scmp.ne.s32.totalorder %s332, %s334
      %p338 = scmp.eq.s32.totalorder %s25, 0
      %p339 = por %p337, %p338
      %p340 = scmp.ne.s32.totalorder %s332, %s334
      %p341 = scmp.eq.s32.totalorder %s30, 2
      %p342 = por %p340, %p341
      %p343 = scmp.ne.s32.totalorder %s334, %s335
      %p344 = scmp.eq.s32.totalorder %s30, 0
      %p345 = por %p343, %p344
      %p346 = scmp.ne.s32.totalorder %s334, %s335
      %p347 = scmp.eq.s32.totalorder %s31, 2
      %p348 = por %p346, %p347
      %p350 = scmp.ne.s32.totalorder %s335, %s349
      %p351 = scmp.eq.s32.totalorder %s31, 0
      %p352 = por %p350, %p351
      %s353 = ssub.s32 %s25, %s32
      %p354 = scmp.eq.s32.totalorder %s353, 0
      %s356 = sadd.s32 %s355, 1
      %s357 = scalar_select %p354, %s355, %s356
      %p360 = pneg %p354
      %p361 = scmp.eq.s32.totalorder %s25, 2
      %p362 = por %p360, %p361
      %p363 = scmp.ne.s32.totalorder %s355, %s358
      %p364 = scmp.eq.s32.totalorder %s25, 0
      %p365 = por %p363, %p364
      %p366 = scmp.ne.s32.totalorder %s355, %s358
      %p367 = scmp.eq.s32.totalorder %s30, 2
      %p368 = por %p366, %p367
      %p369 = scmp.ne.s32.totalorder %s358, %s359
      %p370 = scmp.eq.s32.totalorder %s30, 0
      %p371 = por %p369, %p370
      %p372 = scmp.ne.s32.totalorder %s358, %s359
      %p373 = scmp.eq.s32.totalorder %s31, 2
      %p374 = por %p372, %p373
      %p376 = scmp.ne.s32.totalorder %s359, %s375
      %p377 = scmp.eq.s32.totalorder %s31, 0
      %p378 = por %p376, %p377
      %p379 = scmp.le.s32.totalorder 1, %s25
      %p380 = scmp.lt.s32.totalorder %s25, 4
      %p381 = pnand %p379, %p380
      %p382 = pneg %p381
      // Predicated region
      $region9: #{tpu_custom_call.1} parent=5 // pred_check
        _
      $region10: #{tpu_custom_call.1} parent=5 // pred_check_branch
        %384 = sbr.rel (%p381) target = $region12
      $region11: #{tpu_custom_call.1} parent=5 // pred_region
        %s385 = ssub.s32 %s25, 1
        // Predicated region
        $region13: #{tpu_custom_call.1} parent=11 // pred_check
          %p386 = pneg %p72
        $region14: #{tpu_custom_call.1} parent=11 // pred_check_branch
          %388 = sbr.rel (%p386) target = $region16
        $region15: #{tpu_custom_call.1} parent=11 // pred_region
          _
        $region16: #{tpu_custom_call.1} parent=11 // pred_fallthru
          _
        // Predicated region
        $region17: #{tpu_custom_call.1} parent=11 // pred_check
          %p389 = pneg %p93
        $region18: #{tpu_custom_call.1} parent=11 // pred_check_branch
          %391 = sbr.rel (%p389) target = $region20
        $region19: #{tpu_custom_call.1} parent=11 // pred_region
          %393 = vsyncadd [#allocation3], 0
          %s395 = sshll.u32 %s2, 4
          %s396 = int_to_ptr.hbm [resolvable:$true] %s395
          %s397 = sshll.u32 [#allocation2], 4
          %s398 = int_to_ptr.vmem [resolvable:$true] %s397
          %400 = dma.hbm_to_vmem [thread:$0]  %s396, 16, %s398, [#allocation3]
        $region20: #{tpu_custom_call.1} parent=11 // pred_fallthru
          _
        // Predicated region
        $region21: #{tpu_custom_call.1} parent=11 // pred_check
          %p401 = pneg %p114
        $region22: #{tpu_custom_call.1} parent=11 // pred_check_branch
          %403 = sbr.rel (%p401) target = $region24
        $region23: #{tpu_custom_call.1} parent=11 // pred_region
          %405 = vsyncadd [#allocation5], 0
          %s407 = sshll.u32 %s3, 4
          %s408 = int_to_ptr.hbm [resolvable:$true] %s407
          %s409 = sshll.u32 [#allocation4], 4
          %s410 = int_to_ptr.vmem [resolvable:$true] %s409
          %412 = dma.hbm_to_vmem [thread:$0]  %s408, 16, %s410, [#allocation5]
        $region24: #{tpu_custom_call.1} parent=11 // pred_fallthru
          _
        // Predicated region
        $region25: #{tpu_custom_call.1} parent=11 // pred_check
          %p413 = pneg %p135
        $region26: #{tpu_custom_call.1} parent=11 // pred_check_branch
          %415 = sbr.rel (%p413) target = $region28
        $region27: #{tpu_custom_call.1} parent=11 // pred_region
          %417 = vsyncadd [#allocation5], 0
          %s419 = sshll.u32 %s4, 4
          %s420 = int_to_ptr.hbm [resolvable:$true] %s419
          %s421 = sshll.u32 [#allocation6], 4
          %s422 = int_to_ptr.vmem [resolvable:$true] %s421
          %424 = dma.hbm_to_vmem [thread:$0]  %s420, 16, %s422, [#allocation5]
        $region28: #{tpu_custom_call.1} parent=11 // pred_fallthru
          _
        // Predicated region
        $region29: #{tpu_custom_call.1} parent=11 // pred_check
          %p425 = pneg %p156
        $region30: #{tpu_custom_call.1} parent=11 // pred_check_branch
          %427 = sbr.rel (%p425) target = $region32
        $region31: #{tpu_custom_call.1} parent=11 // pred_region
          _
        $region32: #{tpu_custom_call.1} parent=11 // pred_fallthru
          _
        // Predicated region
        $region33: #{tpu_custom_call.1} parent=11 // pred_check
          %p428 = pneg %p177
        $region34: #{tpu_custom_call.1} parent=11 // pred_check_branch
          %430 = sbr.rel (%p428) target = $region36
        $region35: #{tpu_custom_call.1} parent=11 // pred_region
          %432 = vsyncadd [#allocation8], 0
          %s434 = sshll.u32 %s6, 4
          %s435 = int_to_ptr.hbm [resolvable:$true] %s434
          %s436 = sshll.u32 [#allocation7], 4
          %s437 = int_to_ptr.vmem [resolvable:$true] %s436
          %439 = dma.hbm_to_vmem [thread:$0]  %s435, 16, %s437, [#allocation8]
        $region36: #{tpu_custom_call.1} parent=11 // pred_fallthru
          _
        // Predicated region
        $region37: #{tpu_custom_call.1} parent=11 // pred_check
          %p440 = pneg %p198
        $region38: #{tpu_custom_call.1} parent=11 // pred_check_branch
          %442 = sbr.rel (%p440) target = $region40
        $region39: #{tpu_custom_call.1} parent=11 // pred_region
          %444 = vsyncadd [#allocation8], 0
          %s446 = sshll.u32 %s7, 4
          %s447 = int_to_ptr.hbm [resolvable:$true] %s446
          %s448 = sshll.u32 [#allocation9], 4
          %s449 = int_to_ptr.vmem [resolvable:$true] %s448
          %451 = dma.hbm_to_vmem [thread:$0]  %s447, 16, %s449, [#allocation8]
        $region40: #{tpu_custom_call.1} parent=11 // pred_fallthru
          _
        // Predicated region
        $region41: #{tpu_custom_call.1} parent=11 // pred_check
          %p452 = pneg %p219
        $region42: #{tpu_custom_call.1} parent=11 // pred_check_branch
          %454 = sbr.rel (%p452) target = $region44
        $region43: #{tpu_custom_call.1} parent=11 // pred_region
          %456 = vsyncadd [#allocation11], 0
          %s458 = sshll.u32 %s8, 4
          %s459 = int_to_ptr.hbm [resolvable:$true] %s458
          %s460 = sshll.u32 [#allocation10], 4
          %s461 = int_to_ptr.vmem [resolvable:$true] %s460
          %463 = dma.hbm_to_vmem [thread:$0]  %s459, 16, %s461, [#allocation11]
        $region44: #{tpu_custom_call.1} parent=11 // pred_fallthru
          _
        // Predicated region
        $region45: #{tpu_custom_call.1} parent=11 // pred_check
          %p464 = pneg %p240
        $region46: #{tpu_custom_call.1} parent=11 // pred_check_branch
          %466 = sbr.rel (%p464) target = $region48
        $region47: #{tpu_custom_call.1} parent=11 // pred_region
          _
        $region48: #{tpu_custom_call.1} parent=11 // pred_fallthru
          _
        // Predicated region
        $region49: #{tpu_custom_call.1} parent=11 // pred_check
          %p467 = pneg %p261
        $region50: #{tpu_custom_call.1} parent=11 // pred_check_branch
          %469 = sbr.rel (%p467) target = $region52
        $region51: #{tpu_custom_call.1} parent=11 // pred_region
          _
        $region52: #{tpu_custom_call.1} parent=11 // pred_fallthru
          _
        // Predicated region
        $region53: #{tpu_custom_call.1} parent=11 // pred_check
          %p470 = pneg %p282
        $region54: #{tpu_custom_call.1} parent=11 // pred_check_branch
          %472 = sbr.rel (%p470) target = $region56
        $region55: #{tpu_custom_call.1} parent=11 // pred_region
          %474 = vsyncadd [#allocation11], 0
          %s476 = sshll.u32 %s11, 4
          %s477 = int_to_ptr.hbm [resolvable:$true] %s476
          %s478 = sshll.u32 [#allocation12], 4
          %s479 = int_to_ptr.vmem [resolvable:$true] %s478
          %481 = dma.hbm_to_vmem [thread:$0]  %s477, 16, %s479, [#allocation11]
        $region56: #{tpu_custom_call.1} parent=11 // pred_fallthru
          _
        // Predicated region
        $region57: #{tpu_custom_call.1} parent=11 // pred_check
          %p482 = pneg %p303
        $region58: #{tpu_custom_call.1} parent=11 // pred_check_branch
          %484 = sbr.rel (%p482) target = $region60
        $region59: #{tpu_custom_call.1} parent=11 // pred_region
          _
        $region60: #{tpu_custom_call.1} parent=11 // pred_fallthru
          _
        // Predicated region
        $region61: #{tpu_custom_call.1} parent=11 // pred_check
          %p485 = pneg %p324
        $region62: #{tpu_custom_call.1} parent=11 // pred_check_branch
          %487 = sbr.rel (%p485) target = $region64
        $region63: #{tpu_custom_call.1} parent=11 // pred_region
          _
        $region64: #{tpu_custom_call.1} parent=11 // pred_fallthru
          _
        // Predicated region
        $region65: #{tpu_custom_call.1} parent=11 // pred_check
          %p488 = pneg %p345
        $region66: #{tpu_custom_call.1} parent=11 // pred_check_branch
          %490 = sbr.rel (%p488) target = $region68
        $region67: #{tpu_custom_call.1} parent=11 // pred_region
          _
        $region68: #{tpu_custom_call.1} parent=11 // pred_fallthru
          _
      $region12: #{tpu_custom_call.1} parent=5 // pred_fallthru
        _
      %p491 = scmp.lt.s32.totalorder %s25, 3
      // Predicated region
      $region69: #{tpu_custom_call.1} parent=5 // pred_check
        %p492 = pneg %p491
      $region70: #{tpu_custom_call.1} parent=5 // pred_check_branch
        %494 = sbr.rel (%p492) target = $region72
      $region71: #{tpu_custom_call.1} parent=5 // pred_region
        // Predicated region
        $region73: #{tpu_custom_call.1} parent=71 // pred_check
          %p495 = pneg %p45
        $region74: #{tpu_custom_call.1} parent=71 // pred_check_branch
          %497 = sbr.rel (%p495) target = $region76
        $region75: #{tpu_custom_call.1} parent=71 // pred_region
          %s498 = smul.u32 2, %s25
          %p499 = scmp.lt.s32.totalorder %s498, 5
          %s500 = scalar_select %p499, %s498, 5
          %s501 = smul.addr %s500, 8
          %s502 = scalar_lea.vmem %s0, %s501
          %s503 = smul.u32 2, %s25
        $region76: #{tpu_custom_call.1} parent=71 // pred_fallthru
          _
      $region72: #{tpu_custom_call.1} parent=5 // pred_fallthru
        _
      %p504 = scmp.le.s32.totalorder 1, %s25
      %p505 = scmp.lt.s32.totalorder %s25, 4
      %p506 = pnand %p504, %p505
      %p507 = pneg %p506
      // Predicated region
      $region77: #{tpu_custom_call.1} parent=5 // pred_check
        _
      $region78: #{tpu_custom_call.1} parent=5 // pred_check_branch
        %509 = sbr.rel (%p506) target = $region80
      $region79: #{tpu_custom_call.1} parent=5 // pred_region
        %s510 = ssub.s32 %s25, 1
        // Predicated region
        $region81: #{tpu_custom_call.1} parent=79 // pred_check
          %p511 = pneg %p93
        $region82: #{tpu_custom_call.1} parent=79 // pred_check_branch
          %513 = sbr.rel (%p511) target = $region84
        $region83: #{tpu_custom_call.1} parent=79 // pred_region
          %515 = dma.done [#allocation3], 16
        $region84: #{tpu_custom_call.1} parent=79 // pred_fallthru
          _
        // Predicated region
        $region85: #{tpu_custom_call.1} parent=79 // pred_check
          %p516 = pneg %p114
        $region86: #{tpu_custom_call.1} parent=79 // pred_check_branch
          %518 = sbr.rel (%p516) target = $region88
        $region87: #{tpu_custom_call.1} parent=79 // pred_region
          %520 = dma.done [#allocation5], 16
        $region88: #{tpu_custom_call.1} parent=79 // pred_fallthru
          _
        // Predicated region
        $region89: #{tpu_custom_call.1} parent=79 // pred_check
          %p521 = pneg %p135
        $region90: #{tpu_custom_call.1} parent=79 // pred_check_branch
          %523 = sbr.rel (%p521) target = $region92
        $region91: #{tpu_custom_call.1} parent=79 // pred_region
          %525 = dma.done [#allocation5], 16
        $region92: #{tpu_custom_call.1} parent=79 // pred_fallthru
          _
        // Predicated region
        $region93: #{tpu_custom_call.1} parent=79 // pred_check
          %p526 = pneg %p177
        $region94: #{tpu_custom_call.1} parent=79 // pred_check_branch
          %528 = sbr.rel (%p526) target = $region96
        $region95: #{tpu_custom_call.1} parent=79 // pred_region
          %530 = dma.done [#allocation8], 16
        $region96: #{tpu_custom_call.1} parent=79 // pred_fallthru
          _
        // Predicated region
        $region97: #{tpu_custom_call.1} parent=79 // pred_check
          %p531 = pneg %p198
        $region98: #{tpu_custom_call.1} parent=79 // pred_check_branch
          %533 = sbr.rel (%p531) target = $region100
        $region99: #{tpu_custom_call.1} parent=79 // pred_region
          %535 = dma.done [#allocation8], 16
        $region100: #{tpu_custom_call.1} parent=79 // pred_fallthru
          _
        // Predicated region
        $region101: #{tpu_custom_call.1} parent=79 // pred_check
          %p536 = pneg %p219
        $region102: #{tpu_custom_call.1} parent=79 // pred_check_branch
          %538 = sbr.rel (%p536) target = $region104
        $region103: #{tpu_custom_call.1} parent=79 // pred_region
          %540 = dma.done [#allocation11], 16
        $region104: #{tpu_custom_call.1} parent=79 // pred_fallthru
          _
        // Predicated region
        $region105: #{tpu_custom_call.1} parent=79 // pred_check
          %p541 = pneg %p282
        $region106: #{tpu_custom_call.1} parent=79 // pred_check_branch
          %543 = sbr.rel (%p541) target = $region108
        $region107: #{tpu_custom_call.1} parent=79 // pred_region
          %545 = dma.done [#allocation11], 16
        $region108: #{tpu_custom_call.1} parent=79 // pred_fallthru
          _
        %s546 = smul.u32 2, %s30
        %p547 = scmp.lt.s32.totalorder %s546, 5
        %s548 = scalar_select %p547, %s546, 5
        %s549 = smul.addr %s548, 8
        %s550 = scalar_lea.vmem %s0, %s549
        %p551 = pneg %p51
        %p552 = pneg %p48
        %p553 = pneg %p72
        %p554 = pneg %p69
        %p555 = pneg %p93
        %p556 = pneg %p90
        %p557 = pneg %p114
        %p558 = pneg %p111
        %p559 = pneg %p135
        %p560 = pneg %p132
        %p561 = pneg %p156
        %p562 = pneg %p153
        %p563 = pneg %p177
        %p564 = pneg %p174
        %p565 = pneg %p198
        %p566 = pneg %p195
        %p567 = pneg %p219
        %p568 = pneg %p216
        %p569 = pneg %p240
        %p570 = pneg %p237
        %p571 = pneg %p261
        %p572 = pneg %p258
        %p573 = pneg %p282
        %p574 = pneg %p279
        %p575 = pneg %p303
        %p576 = pneg %p300
        %p577 = pneg %p324
        %p578 = pneg %p321
        %p579 = pneg %p345
        %p580 = pneg %p342
        %p581 = pneg %p371
        %p582 = pneg %p368
        %s583 = smul.u32 2, %s30
        %p584 = scmp.lt.s32.totalorder %s583, 5
        %s585 = scalar_select %p584, %s583, 5
        %s586 = smul.addr %s585, 8
        %s587 = scalar_lea.vmem %s15, %s586
        %s588 = smul.u32 2, %s30
        %p589 = scmp.lt.s32.totalorder %s588, 5
        %s590 = scalar_select %p589, %s588, 5
        %s591 = smul.addr %s590, 8
        %s592 = scalar_lea.vmem %s0, %s591
        %s593 = smul.u32 2, %s30
        %s594 = smul.u32 2, %s30
        %p595 = scmp.lt.s32.totalorder %s594, 5
        %s596 = scalar_select %p595, %s594, 5
        %s597 = smul.addr %s596, 8
        %s598 = scalar_lea.vmem %s15, %s597
        %s599 = smul.u32 2, %s30
        %v600 = vld [vmem:[%s592] sm:$0xff]
        %v601 = vld [vmem:[%s592 + $0x8] sm:$0xff]
        %v602 = vld [vmem:[%s1] sm:$0xff]
        %v603 = vld [vmem:[%s1 + $0x8] sm:$0xff]
        %v604 = vld [vmem:[#allocation2] sm:$0x1]
        %v606 = vperm.slane %v604, 0
        %vm608 = vcmask 130048
        %v610 = vsel %vm608, %v600, 0
        %v613 = vsel %vm608, %v601, 0
        %615 = vmatpush.msra.mxu0 0.0
        %616 = vmatpush.msra.mxu0 0.0
        %617 = vmatpush.msra.mxu0 0.0
        %618 = vmatpush.msra.mxu0 0.0
        %619 = vmatpush.msra.mxu0 0.0
        %620 = vmatpush.msra.mxu0 0.0
        %621 = vmatpush.msra.mxu0 0.0
        %622 = vmatpush.msra.mxu0 0.0
        %623 = vmatpush.msra.mxu0 0.0
        %624 = vmatpush.msra.mxu0 0.0
        %625 = vmatpush.msra.mxu0 0.0
        %626 = vmatpush.msra.mxu0 0.0
        %627 = vmatpush.msra.mxu0 0.0
        %628 = vmatpush.msra.mxu0 0.0
        %629 = vmatpush.msra.mxu0 %v603
        %630 = vmatpush.msra.mxu0 %v602
        %631 = vmatmul.f32.gmra.mxu0 %v610
        %v632 = vpop.f32.mrf.mxu0
        %v633 = vadd.f32 %v606, %v632
        %634 = vmatmul.f32.gmra.mxu0 %v613
        %v635 = vpop.f32.mrf.mxu0
        %v636 = vadd.f32 %v606, %v635
        %637 = vdwg.mxu0
        %v638 = vld [vmem:[#allocation4] sm:$0x1]
        %639 = vset.pattern.permute.xlu0 16
        %640 = vperm.xlu0 %639, %v600
        %v641 = vpop.permute.xlu0 %640
        %643 = vset.pattern.permute.xlu0 16
        %644 = vperm.xlu0 %643, %v601
        %v645 = vpop.permute.xlu0 %644
        %v648 = vperm.slane %v638, 0
        %v650 = vmul.f32 %v641, %v648
        %v651 = vmul.f32 %v645, %v648
        %v652 = vld [vmem:[#allocation6] sm:$0x1]
        %v654 = vperm.slane %v652, 0
        %v656 = vadd.f32 %v650, %v654
        %v657 = vadd.f32 %v651, %v654
        %v658 = vmul.f32 %v633, %v656
        %v659 = vmul.f32 %v636, %v657
        %v660 = vmax.f32 %v658, 0.0
        %v661 = vmax.f32 %v659, 0.0
        %v662 = vld [vmem:[%s5] sm:$0xff]
        %v663 = vld [vmem:[%s5 + $0x8] sm:$0xff]
        %v664 = vld [vmem:[%s5 + $0x10] sm:$0xff]
        %v665 = vld [vmem:[%s5 + $0x18] sm:$0xff]
        %v666 = vld [vmem:[%s5 + $0x20] sm:$0xff]
        %v667 = vld [vmem:[%s5 + $0x28] sm:$0xff]
        %v668 = vld [vmem:[%s5 + $0x30] sm:$0xff]
        %v669 = vld [vmem:[%s5 + $0x38] sm:$0xff]
        %v670 = vld [vmem:[#allocation7] sm:$0x1]
        %v672 = vperm.slane %v670, 0
        %vm674 = vcmask 523264
        %v676 = vsel %vm674, %v660, 0
        %v679 = vsel %vm674, %v661, 0
        %681 = vmatpush.msra.mxu0 0.0
        %682 = vmatpush.msra.mxu0 0.0
        %683 = vmatpush.msra.mxu0 0.0
        %684 = vmatpush.msra.mxu0 0.0
        %685 = vmatpush.msra.mxu0 0.0
        %686 = vmatpush.msra.mxu0 0.0
        %687 = vmatpush.msra.mxu0 0.0
        %688 = vmatpush.msra.mxu0 0.0
        %689 = vmatpush.msra.mxu0 %v669
        %690 = vmatpush.msra.mxu0 %v668
        %691 = vmatpush.msra.mxu0 %v667
        %692 = vmatpush.msra.mxu0 %v666
        %693 = vmatpush.msra.mxu0 %v665
        %694 = vmatpush.msra.mxu0 %v664
        %695 = vmatpush.msra.mxu0 %v663
        %696 = vmatpush.msra.mxu0 %v662
        %697 = vmatmul.f32.gmra.mxu0 %v676
        %v698 = vpop.f32.mrf.mxu0
        %v699 = vadd.f32 %v672, %v698
        %700 = vmatmul.f32.gmra.mxu0 %v679
        %v701 = vpop.f32.mrf.mxu0
        %v702 = vadd.f32 %v672, %v701
        %703 = vdwg.mxu0
        %v704 = vld [vmem:[#allocation9] sm:$0x1]
        %v706 = vperm.slane %v704, 0
        %v708 = vmul.f32 %v641, %v706
        %v709 = vmul.f32 %v645, %v706
        %v710 = vld [vmem:[#allocation10] sm:$0x1]
        %v712 = vperm.slane %v710, 0
        %v714 = vadd.f32 %v708, %v712
        %v715 = vadd.f32 %v709, %v712
        %v716 = vmul.f32 %v699, %v714
        %v717 = vmul.f32 %v702, %v715
        %v718 = vmax.f32 %v716, 0.0
        %v719 = vmax.f32 %v717, 0.0
        %v720 = vld [vmem:[%s9] sm:$0xff]
        %v721 = vld [vmem:[%s9 + $0x8] sm:$0xff]
        %v722 = vld [vmem:[%s9 + $0x10] sm:$0xff]
        %v723 = vld [vmem:[%s9 + $0x18] sm:$0xff]
        %v724 = vld [vmem:[%s9 + $0x20] sm:$0xff]
        %v725 = vld [vmem:[%s9 + $0x28] sm:$0xff]
        %v726 = vld [vmem:[%s9 + $0x30] sm:$0xff]
        %v727 = vld [vmem:[%s9 + $0x38] sm:$0xff]
        %v728 = vld [vmem:[%s10] sm:$0x1]
        %v730 = vperm.slane %v728, 0
        %v733 = vsel %vm674, %v718, 0
        %v736 = vsel %vm674, %v719, 0
        %738 = vmatpush.msra.mxu0 0.0
        %739 = vmatpush.msra.mxu0 0.0
        %740 = vmatpush.msra.mxu0 0.0
        %741 = vmatpush.msra.mxu0 0.0
        %742 = vmatpush.msra.mxu0 0.0
        %743 = vmatpush.msra.mxu0 0.0
        %744 = vmatpush.msra.mxu0 0.0
        %745 = vmatpush.msra.mxu0 0.0
        %746 = vmatpush.msra.mxu0 %v727
        %747 = vmatpush.msra.mxu0 %v726
        %748 = vmatpush.msra.mxu0 %v725
        %749 = vmatpush.msra.mxu0 %v724
        %750 = vmatpush.msra.mxu0 %v723
        %751 = vmatpush.msra.mxu0 %v722
        %752 = vmatpush.msra.mxu0 %v721
        %753 = vmatpush.msra.mxu0 %v720
        %754 = vmatmul.f32.gmra.mxu0 %v733
        %v755 = vpop.f32.mrf.mxu0
        %v756 = vadd.f32 %v730, %v755
        %757 = vmatmul.f32.gmra.mxu0 %v736
        %v758 = vpop.f32.mrf.mxu0
        %v759 = vadd.f32 %v730, %v758
        %760 = vdwg.mxu0
        %v761 = vld [vmem:[#allocation12] sm:$0x1]
        %v763 = vperm.slane %v761, 0
        %v765 = vmul.f32 %v641, %v763
        %v766 = vmul.f32 %v645, %v763
        %v767 = vld [vmem:[%s12] sm:$0x1]
        %v769 = vperm.slane %v767, 0
        %v771 = vadd.f32 %v765, %v769
        %v772 = vadd.f32 %v766, %v769
        %v773 = vmul.f32 %v756, %v771
        %v774 = vmul.f32 %v759, %v772
        %v775 = vmax.f32 %v773, 0.0
        %v776 = vmax.f32 %v774, 0.0
        %v777 = vld [vmem:[%s13] sm:$0xff]
        %v778 = vld [vmem:[%s13 + $0x8] sm:$0xff]
        %v779 = vld [vmem:[%s13 + $0x10] sm:$0xff]
        %v780 = vld [vmem:[%s13 + $0x18] sm:$0xff]
        %v781 = vld [vmem:[%s13 + $0x20] sm:$0xff]
        %v782 = vld [vmem:[%s13 + $0x28] sm:$0xff]
        %v783 = vld [vmem:[%s13 + $0x30] sm:$0xff]
        %v784 = vld [vmem:[%s13 + $0x38] sm:$0xff]
        %v785 = vld [vmem:[%s14] sm:$0x1]
        %v787 = vperm.slane %v785, 0
        %v790 = vsel %vm674, %v775, 0
        %v793 = vsel %vm674, %v776, 0
        %795 = vmatpush.msra.mxu0 0.0
        %796 = vmatpush.msra.mxu0 0.0
        %797 = vmatpush.msra.mxu0 0.0
        %798 = vmatpush.msra.mxu0 0.0
        %799 = vmatpush.msra.mxu0 0.0
        %800 = vmatpush.msra.mxu0 0.0
        %801 = vmatpush.msra.mxu0 0.0
        %802 = vmatpush.msra.mxu0 0.0
        %803 = vmatpush.msra.mxu0 %v784
        %804 = vmatpush.msra.mxu0 %v783
        %805 = vmatpush.msra.mxu0 %v782
        %806 = vmatpush.msra.mxu0 %v781
        %807 = vmatpush.msra.mxu0 %v780
        %808 = vmatpush.msra.mxu0 %v779
        %809 = vmatpush.msra.mxu0 %v778
        %810 = vmatpush.msra.mxu0 %v777
        %811 = vmatmul.f32.gmra.mxu0 %v790
        %v812 = vpop.f32.mrf.mxu0
        %v813 = vadd.f32 %v787, %v812
        %814 = vmatmul.f32.gmra.mxu0 %v793
        %v815 = vpop.f32.mrf.mxu0
        %v816 = vadd.f32 %v787, %v815
        %817 = vdwg.mxu0
        %vm818 = vcmask 64512
        %819 = vst.msk [vmem:[%s598] sm:$0xff] %vm818, %v813
        %820 = vst.msk [vmem:[%s598 + $0x8] sm:$0xff] %vm818, %v816
        %s821 = smul.u32 2, %s30
        %p822 = scmp.lt.s32.totalorder %s821, 5
        %s823 = scalar_select %p822, %s821, 5
        %s824 = smul.addr %s823, 8
        %s825 = scalar_lea.vmem %s15, %s824
        // Predicated region
        $region109: #{tpu_custom_call.1} parent=79 // pred_check
          %p826 = pneg %p368
        $region110: #{tpu_custom_call.1} parent=79 // pred_check_branch
          %828 = sbr.rel (%p826) target = $region112
        $region111: #{tpu_custom_call.1} parent=79 // pred_region
          %s829 = smul.u32 2, %s30
        $region112: #{tpu_custom_call.1} parent=79 // pred_fallthru
          _
      $region80: #{tpu_custom_call.1} parent=5 // pred_fallthru
        _
      %p830 = scmp.le.s32.totalorder 2, %s25
      // Predicated region
      $region113: #{tpu_custom_call.1} parent=5 // pred_check
        %p831 = pneg %p830
      $region114: #{tpu_custom_call.1} parent=5 // pred_check_branch
        %833 = sbr.rel (%p831) target = $region116
      $region115: #{tpu_custom_call.1} parent=5 // pred_region
        %s834 = ssub.s32 %s25, 2
        // Predicated region
        $region117: #{tpu_custom_call.1} parent=115 // pred_check
          %p835 = pneg %p374
        $region118: #{tpu_custom_call.1} parent=115 // pred_check_branch
          %837 = sbr.rel (%p835) target = $region120
        $region119: #{tpu_custom_call.1} parent=115 // pred_region
          %s838 = smul.u32 2, %s31
          %p839 = scmp.lt.s32.totalorder %s838, 5
          %s840 = scalar_select %p839, %s838, 5
          %s841 = smul.addr %s840, 8
          %s842 = scalar_lea.vmem %s15, %s841
        $region120: #{tpu_custom_call.1} parent=115 // pred_fallthru
          _
      $region116: #{tpu_custom_call.1} parent=5 // pred_fallthru
        _
    $region6: #{tpu_custom_call.1} parent=1 // loop_footer
      %s29 = sadd.s32 1, %s25
    $region7: #{tpu_custom_call.1} parent=1 // loop_footer_branch
      %24 = sbr.rel target = $region3
    $region8: #{tpu_custom_call.1} parent=1 // loop_exit
      _
    %843 = vsyncpa [#allocation3], 1
    %s844 = scalar_lea.sflag [#allocation3], 1
    %845 = vsyncpa %s844, 1
    %846 = vsyncpa [#allocation5], 1
    %847 = vsyncpa [#allocation8], 1
    %848 = vsyncpa [#allocation11], 1

</llo_original>
